<compile_context>
chip_gen: v7x
topology: tpu7x:2x2x1
jax: 0.10.0
libtpu: 0.0.40
codegen_flags: <defaults>
</compile_context>

<pallas_src>
import jax
import jax.numpy as jnp
from jax import lax
from jax.experimental import pallas as pl
from jax.experimental.pallas import tpu as pltpu


def _round_up(x: int, m: int) -> int:
    return ((x + m - 1) // m) * m


def _make_gather_concat_kernel(n_tables, tok_block, v_total):
    """Multi-hot (tok_block, v_total) @ block-diagonal bf16x3 table -> concat embeds."""

    def kernel(idx_ref, table_ref, out_ref):
        # idx_ref:   (tok_block, n_tables) int32 -- ids already offset into super-table rows
        # table_ref: (3, v_total, total)   bf16  -- exact bf16x3 split of the f32 table (VMEM resident)
        # out_ref:   (tok_block, total)    f32   -- concatenated embeddings
        iota = lax.broadcasted_iota(jnp.int32, (tok_block, v_total), 1)
        hot = iota == idx_ref[:, 0:1]
        for j in range(1, n_tables):
            hot = jnp.logical_or(hot, iota == idx_ref[:, j:j + 1])
        # 0/1 are exact in bf16 -> the one-hot LHS needs only a single MXU pass.
        onehot = jnp.where(hot, 1.0, 0.0).astype(jnp.bfloat16)
        # Three single-pass bf16 dots; hi + mid + lo reconstructs the f32 table exactly,
        # and each dot merely selects rows, so the gather is (bit-)exact.
        acc = jnp.dot(onehot, table_ref[0], preferred_element_type=jnp.float32)
        acc += jnp.dot(onehot, table_ref[1], preferred_element_type=jnp.float32)
        acc += jnp.dot(onehot, table_ref[2], preferred_element_type=jnp.float32)
        out_ref[...] = acc

    return kernel


def embedder_forward(x, tables, extra_inputs=None, *, tok_block=512):
    """JAX/Pallas equivalent of Embedder.forward.

    x:            (batch, seq) int32 word ids
    tables:       [word_table (vocab, embed), extra_table_i (vocab_i, embed_i), ...]
    extra_inputs: optional list of (batch, seq) int32 id arrays (one per extra table).
    """
    if extra_inputs:
        idx_list = [x] + list(extra_inputs)
        used_tables = list(tables)
    else:
        idx_list = [x]
        used_tables = [tables[0]]

    batch, seq = x.shape
    n_tok = batch * seq
    n_tables = len(used_tables)
    vocab_sizes = [int(t.shape[0]) for t in used_tables]
    embed_sizes = [int(t.shape[1]) for t in used_tables]
    total = sum(embed_sizes)

    # ---- block-diagonal super table: raw cumulative row offsets (no per-vocab 128 padding) ----
    row_starts, r = [], 0
    for v in vocab_sizes:
        row_starts.append(r)
        r += v
    v_total = _round_up(r, 128)            # lane-align only the contraction dim

    table_bytes = 3 * v_total * total * 2  # bf16x3 stack (per-core copy on v7x)
    if table_bytes > 8 * 1024 * 1024:
        # TODO(synk): production-sized tables exceed a safe VMEM-resident budget
        # (v7x: 64 MiB VMEM total, 32 MiB default scoped); switch to memory_space=pl.ANY
        # + double-buffered row-gather DMA for that regime.
        raise NotImplementedError("embedding tables too large for the VMEM-resident path")

    super_table = jnp.zeros((v_total, total), jnp.float32)
    c = 0
    for t, rs, v, e in zip(used_tables, row_starts, vocab_sizes, embed_sizes):
        super_table = super_table.at[rs:rs + v, c:c + e].set(t.astype(jnp.float32))
        c += e
    # Exact bf16x3 split (would be done once at init in a real model):
    # super_table == hi + mid + lo, each term exact, so 3 bf16 passes == exact f32 gather.
    hi = super_table.astype(jnp.bfloat16)
    r0 = super_table - hi.astype(jnp.float32)
    mid = r0.astype(jnp.bfloat16)
    lo = (r0 - mid.astype(jnp.float32)).astype(jnp.bfloat16)
    table3 = jnp.stack([hi, mid, lo], axis=0)          # (3, v_total, total) bf16

    # ---- token blocking ----
    min_block = 16                                      # one native bf16 sublane tile
    n_tok8 = _round_up(n_tok, 8)
    tok_block = min(_round_up(tok_block, 8), max(n_tok8, min_block))
    tok_block = max(tok_block, min_block)
    # Prefer >= 2 token blocks so v7x's two TensorCores both get work on the "parallel" axis.
    if n_tok8 // tok_block < 2 and n_tok8 >= 2 * min_block:
        tok_block = max(min_block, _round_up(pl.cdiv(n_tok8, 2), 8))
    n_tok_pad = _round_up(n_tok, tok_block)
    n_blocks = n_tok_pad // tok_block

    # ---- token ids: clamp (matches jnp.take's clamping semantics) and pre-offset rows ----
    flat_ids = [
        jnp.clip(jnp.reshape(i, (n_tok,)).astype(jnp.int32), 0, v - 1) + rs
        for i, v, rs in zip(idx_list, vocab_sizes, row_starts)
    ]
    idx_all = jnp.stack(flat_ids, axis=1)               # (n_tok, n_tables)
    # Padded rows get id 0 (a real word-table row); they are sliced off below and
    # must never be exposed to downstream code.
    idx_all = jnp.pad(idx_all, ((0, n_tok_pad - n_tok), (0, 0)))

    kernel = _make_gather_concat_kernel(n_tables, tok_block, v_total)

    def run(table_pipeline_mode):
        if table_pipeline_mode is None:
            table_spec = pl.BlockSpec((3, v_total, total), lambda i: (0, 0, 0))
        else:
            # Constant index_map -> fetched once; single-buffering halves its VMEM reservation.
            table_spec = pl.BlockSpec((3, v_total, total), lambda i: (0, 0, 0),
                                      pipeline_mode=table_pipeline_mode)
        grid_spec = pltpu.PrefetchScalarGridSpec(
            num_scalar_prefetch=0,
            grid=(n_blocks,),
            in_specs=[
                pl.BlockSpec((tok_block, n_tables), lambda i: (i, 0)),   # token-id block
                table_spec,                                              # resident super table
            ],
            # Unpadded, exact-width output block (last dim == full array dim): no padded
            # HBM writes and no post-kernel lane slice.
            out_specs=pl.BlockSpec((tok_block, total), lambda i: (i, 0)),
        )
        return pl.pallas_call(
            kernel,
            grid_spec=grid_spec,
            out_shape=jax.ShapeDtypeStruct((n_tok_pad, total), jnp.float32),
            compiler_params=pltpu.CompilerParams(
                dimension_semantics=("parallel",)),      # token blocks are independent
        )(idx_all, table3)

    try:
        out_flat = run(pl.Buffered(1))
    except Exception:
        # Fallback if this jax/libtpu combination rejects single-buffered pipeline_mode.
        out_flat = run(None)

    return out_flat[:n_tok].reshape(batch, seq, total)


def reference_forward(x, tables, extra_inputs=None):
    """Pure-JAX reference (mirrors the PyTorch forward)."""
    outs = [jnp.take(tables[0], x, axis=0)]
    if extra_inputs:
        for j, ei in enumerate(extra_inputs):
            outs.append(jnp.take(tables[j + 1], ei, axis=0))
    return jnp.concatenate(outs, axis=2) if len(outs) > 1 else outs[0]


if __name__ == "__main__":
    # Module config (small, consistent with the PyTorch __init__):
    vocab_size = 50
    embed_size = 32
    extra_categorical_nums = [10, 7]
    extra_embed_sizes = [16, 8]

    batch, seq = 2, 16

    # Deterministic parameter init (synthetic weights, like nn.Embedding's N(0,1)).
    key = jax.random.PRNGKey(0)
    k_w, k_e0, k_e1, k_x, k_x0, k_x1 = jax.random.split(key, 6)
    word_table = jax.random.normal(k_w, (vocab_size, embed_size), jnp.float32)
    extra_table0 = jax.random.normal(
        k_e0, (extra_categorical_nums[0], extra_embed_sizes[0]), jnp.float32)
    extra_table1 = jax.random.normal(
        k_e1, (extra_categorical_nums[1], extra_embed_sizes[1]), jnp.float32)
    tables = [word_table, extra_table0, extra_table1]

    # Deterministic example inputs.
    x = jax.random.randint(k_x, (batch, seq), 0, vocab_size, jnp.int32)
    extra0 = jax.random.randint(k_x0, (batch, seq), 0, extra_categorical_nums[0], jnp.int32)
    extra1 = jax.random.randint(k_x1, (batch, seq), 0, extra_categorical_nums[1], jnp.int32)
    extra_inputs = [extra0, extra1]

    # With extra inputs (concat path).
    out = embedder_forward(x, tables, extra_inputs)
    out = jax.block_until_ready(out)
    ref = reference_forward(x, tables, extra_inputs)
    assert out.shape == (batch, seq, embed_size + sum(extra_embed_sizes))
    assert jnp.allclose(out, ref, rtol=1e-5, atol=1e-5), "mismatch vs reference (with extras)"

    # Without extra inputs (word embedding only).
    out_w = embedder_forward(x, tables, None)
    out_w = jax.block_until_ready(out_w)
    ref_w = reference_forward(x, tables, None)
    assert out_w.shape == (batch, seq, embed_size)
    assert jnp.allclose(out_w, ref_w, rtol=1e-5, atol=1e-5), "mismatch vs reference (word only)"

    print("KERNEL_OK")
</pallas_src>

<mosaic_0001>
module attributes {stable_mosaic.version = 11 : i64} {
  func.func @kernel(%arg0: i32, %arg1: memref<16x3xi32, #tpu.memory_space<vmem>>, %arg2: memref<3x128x56xbf16, #tpu.memory_space<vmem>>, %arg3: memref<16x56xf32, #tpu.memory_space<vmem>>) attributes {dimension_semantics = [#tpu.dimension_semantics<parallel>], iteration_bounds = array<i64: 2>, scalar_prefetch = 0 : i64, scratch_operands = 0 : i64, tpu.core_type = #tpu.core_type<tc>, window_params = [{transform_indices = @transform_0, window_bounds = array<i64: 16, 3>}, {pipeline_mode = #tpu.pipeline_mode<synchronous>, transform_indices = @transform_1, window_bounds = array<i64: 3, 128, 56>}, {transform_indices = @transform_2, window_bounds = array<i64: 16, 56>}]} {
    %0 = tpu.iota {dimensions = array<i32: 1>} : vector<16x128xi32>
    %c0 = arith.constant 0 : index
    %c0_0 = arith.constant 0 : index
    %1 = vector.load %arg1[%c0, %c0_0] : memref<16x3xi32, #tpu.memory_space<vmem>>, vector<16x1xi32>
    %2 = vector.broadcast %1 : vector<16x1xi32> to vector<16x128xi32>
    %3 = arith.cmpi eq, %0, %2 : vector<16x128xi32>
    %c0_1 = arith.constant 0 : index
    %c1 = arith.constant 1 : index
    %4 = vector.load %arg1[%c0_1, %c1] : memref<16x3xi32, #tpu.memory_space<vmem>>, vector<16x1xi32>
    %5 = vector.broadcast %4 : vector<16x1xi32> to vector<16x128xi32>
    %6 = arith.cmpi eq, %0, %5 : vector<16x128xi32>
    %7 = arith.ori %3, %6 : vector<16x128xi1>
    %c0_2 = arith.constant 0 : index
    %c2 = arith.constant 2 : index
    %8 = vector.load %arg1[%c0_2, %c2] : memref<16x3xi32, #tpu.memory_space<vmem>>, vector<16x1xi32>
    %9 = vector.broadcast %8 : vector<16x1xi32> to vector<16x128xi32>
    %10 = arith.cmpi eq, %0, %9 : vector<16x128xi32>
    %11 = arith.ori %7, %10 : vector<16x128xi1>
    %cst = arith.constant 1.000000e+00 : f32
    %cst_3 = arith.constant 0.000000e+00 : f32
    %12 = vector.broadcast %cst : f32 to vector<16x128xf32>
    %13 = vector.broadcast %cst_3 : f32 to vector<16x128xf32>
    %14 = arith.select %11, %12, %13 : vector<16x128xi1>, vector<16x128xf32>
    %15 = arith.truncf %14 : vector<16x128xf32> to vector<16x128xbf16>
    %c0_4 = arith.constant 0 : index
    %c0_5 = arith.constant 0 : index
    %c0_6 = arith.constant 0 : index
    %16 = vector.load %arg2[%c0_4, %c0_5, %c0_6] : memref<3x128x56xbf16, #tpu.memory_space<vmem>>, vector<1x128x56xbf16>
    %17 = vector.shape_cast %16 : vector<1x128x56xbf16> to vector<128x56xbf16>
    %cst_7 = arith.constant dense<0.000000e+00> : vector<16x56xf32>
    %18 = tpu.matmul %15, %17, %cst_7 {dimension_numbers = #tpu.dot_dimension_numbers<[1], [0], [0], [1], [0, 0, 1, 1], [], []>} : vector<16x128xbf16>, vector<128x56xbf16>, vector<16x56xf32> -> vector<16x56xf32>
    %c1_8 = arith.constant 1 : index
    %c0_9 = arith.constant 0 : index
    %c0_10 = arith.constant 0 : index
    %19 = vector.load %arg2[%c1_8, %c0_9, %c0_10] : memref<3x128x56xbf16, #tpu.memory_space<vmem>>, vector<1x128x56xbf16>
    %20 = vector.shape_cast %19 : vector<1x128x56xbf16> to vector<128x56xbf16>
    %cst_11 = arith.constant dense<0.000000e+00> : vector<16x56xf32>
    %21 = tpu.matmul %15, %20, %cst_11 {dimension_numbers = #tpu.dot_dimension_numbers<[1], [0], [0], [1], [0, 0, 1, 1], [], []>} : vector<16x128xbf16>, vector<128x56xbf16>, vector<16x56xf32> -> vector<16x56xf32>
    %22 = arith.addf %18, %21 : vector<16x56xf32>
    %c2_12 = arith.constant 2 : index
    %c0_13 = arith.constant 0 : index
    %c0_14 = arith.constant 0 : index
    %23 = vector.load %arg2[%c2_12, %c0_13, %c0_14] : memref<3x128x56xbf16, #tpu.memory_space<vmem>>, vector<1x128x56xbf16>
    %24 = vector.shape_cast %23 : vector<1x128x56xbf16> to vector<128x56xbf16>
    %cst_15 = arith.constant dense<0.000000e+00> : vector<16x56xf32>
    %25 = tpu.matmul %15, %24, %cst_15 {dimension_numbers = #tpu.dot_dimension_numbers<[1], [0], [0], [1], [0, 0, 1, 1], [], []>} : vector<16x128xbf16>, vector<128x56xbf16>, vector<16x56xf32> -> vector<16x56xf32>
    %26 = arith.addf %22, %25 : vector<16x56xf32>
    %c0_16 = arith.constant 0 : index
    %c0_17 = arith.constant 0 : index
    %27 = vector.load %arg3[%c0_16, %c0_17] : memref<16x56xf32, #tpu.memory_space<vmem>>, vector<16x56xf32>
    tpu.vector_store %arg3[%c0_16, %c0_17], %26 {strides = array<i32>} : memref<16x56xf32, #tpu.memory_space<vmem>>, vector<16x56xf32>,
    return
  }
  func.func @transform_0(%arg0: i32) -> (i32, i32) {
    %c0_i32 = arith.constant 0 : i32
    %c0_i32_0 = arith.constant 0 : i32
    return %arg0, %c0_i32 : i32, i32
  }
  func.func @transform_1(%arg0: i32) -> (i32, i32, i32) {
    %c0_i32 = arith.constant 0 : i32
    %c0_i32_0 = arith.constant 0 : i32
    %c0_i32_1 = arith.constant 0 : i32
    %c0_i32_2 = arith.constant 0 : i32
    return %c0_i32, %c0_i32_0, %c0_i32_1 : i32, i32, i32
  }
  func.func @transform_2(%arg0: i32) -> (i32, i32) {
    %c0_i32 = arith.constant 0 : i32
    %c0_i32_0 = arith.constant 0 : i32
    return %arg0, %c0_i32 : i32, i32
  }
}

module attributes {stable_mosaic.version = 11 : i64} {
  func.func @kernel(%arg0: i32, %arg1: memref<16x3xi32, #tpu.memory_space<vmem>>, %arg2: memref<3x128x56xbf16, #tpu.memory_space<vmem>>, %arg3: memref<16x56xf32, #tpu.memory_space<vmem>>) attributes {dimension_semantics = [#tpu.dimension_semantics<parallel>], iteration_bounds = array<i64: 2>, scalar_prefetch = 0 : i64, scratch_operands = 0 : i64, tpu.core_type = #tpu.core_type<tc>, window_params = [{transform_indices = @transform_0, window_bounds = array<i64: 16, 3>}, {pipeline_mode = #tpu.pipeline_mode<synchronous>, transform_indices = @transform_1, window_bounds = array<i64: 3, 128, 56>}, {transform_indices = @transform_2, window_bounds = array<i64: 16, 56>}]} {
    %0 = tpu.iota {dimensions = array<i32: 1>} : vector<16x128xi32>
    %c0 = arith.constant 0 : index
    %c0_0 = arith.constant 0 : index
    %1 = vector.load %arg1[%c0, %c0_0] : memref<16x3xi32, #tpu.memory_space<vmem>>, vector<16x1xi32>
    %2 = vector.broadcast %1 : vector<16x1xi32> to vector<16x128xi32>
    %3 = arith.cmpi eq, %0, %2 : vector<16x128xi32>
    %c0_1 = arith.constant 0 : index
    %c1 = arith.constant 1 : index
    %4 = vector.load %arg1[%c0_1, %c1] : memref<16x3xi32, #tpu.memory_space<vmem>>, vector<16x1xi32>
    %5 = vector.broadcast %4 : vector<16x1xi32> to vector<16x128xi32>
    %6 = arith.cmpi eq, %0, %5 : vector<16x128xi32>
    %7 = arith.ori %3, %6 : vector<16x128xi1>
    %c0_2 = arith.constant 0 : index
    %c2 = arith.constant 2 : index
    %8 = vector.load %arg1[%c0_2, %c2] : memref<16x3xi32, #tpu.memory_space<vmem>>, vector<16x1xi32>
    %9 = vector.broadcast %8 : vector<16x1xi32> to vector<16x128xi32>
    %10 = arith.cmpi eq, %0, %9 : vector<16x128xi32>
    %11 = arith.ori %7, %10 : vector<16x128xi1>
    %cst = arith.constant 1.000000e+00 : f32
    %cst_3 = arith.constant 0.000000e+00 : f32
    %12 = vector.broadcast %cst : f32 to vector<16x128xf32>
    %13 = vector.broadcast %cst_3 : f32 to vector<16x128xf32>
    %14 = arith.select %11, %12, %13 : vector<16x128xi1>, vector<16x128xf32>
    %15 = arith.truncf %14 : vector<16x128xf32> to vector<16x128xbf16>
    %c0_4 = arith.constant 0 : index
    %c0_5 = arith.constant 0 : index
    %c0_6 = arith.constant 0 : index
    %16 = vector.load %arg2[%c0_4, %c0_5, %c0_6] : memref<3x128x56xbf16, #tpu.memory_space<vmem>>, vector<1x128x56xbf16>
    %17 = vector.shape_cast %16 : vector<1x128x56xbf16> to vector<128x56xbf16>
    %cst_7 = arith.constant dense<0.000000e+00> : vector<16x56xf32>
    %18 = tpu.matmul %15, %17, %cst_7 {dimension_numbers = #tpu.dot_dimension_numbers<[1], [0], [0], [1], [0, 0, 1, 1], [], []>} : vector<16x128xbf16>, vector<128x56xbf16>, vector<16x56xf32> -> vector<16x56xf32>
    %c1_8 = arith.constant 1 : index
    %c0_9 = arith.constant 0 : index
    %c0_10 = arith.constant 0 : index
    %19 = vector.load %arg2[%c1_8, %c0_9, %c0_10] : memref<3x128x56xbf16, #tpu.memory_space<vmem>>, vector<1x128x56xbf16>
    %20 = vector.shape_cast %19 : vector<1x128x56xbf16> to vector<128x56xbf16>
    %cst_11 = arith.constant dense<0.000000e+00> : vector<16x56xf32>
    %21 = tpu.matmul %15, %20, %cst_11 {dimension_numbers = #tpu.dot_dimension_numbers<[1], [0], [0], [1], [0, 0, 1, 1], [], []>} : vector<16x128xbf16>, vector<128x56xbf16>, vector<16x56xf32> -> vector<16x56xf32>
    %22 = arith.addf %18, %21 : vector<16x56xf32>
    %c2_12 = arith.constant 2 : index
    %c0_13 = arith.constant 0 : index
    %c0_14 = arith.constant 0 : index
    %23 = vector.load %arg2[%c2_12, %c0_13, %c0_14] : memref<3x128x56xbf16, #tpu.memory_space<vmem>>, vector<1x128x56xbf16>
    %24 = vector.shape_cast %23 : vector<1x128x56xbf16> to vector<128x56xbf16>
    %cst_15 = arith.constant dense<0.000000e+00> : vector<16x56xf32>
    %25 = tpu.matmul %15, %24, %cst_15 {dimension_numbers = #tpu.dot_dimension_numbers<[1], [0], [0], [1], [0, 0, 1, 1], [], []>} : vector<16x128xbf16>, vector<128x56xbf16>, vector<16x56xf32> -> vector<16x56xf32>
    %26 = arith.addf %22, %25 : vector<16x56xf32>
    %c0_16 = arith.constant 0 : index
    %c0_17 = arith.constant 0 : index
    %27 = vector.load %arg3[%c0_16, %c0_17] : memref<16x56xf32, #tpu.memory_space<vmem>>, vector<16x56xf32>
    tpu.vector_store %arg3[%c0_16, %c0_17], %26 {strides = array<i32>} : memref<16x56xf32, #tpu.memory_space<vmem>>, vector<16x56xf32>,
    return
  }
  func.func @transform_0(%arg0: i32) -> (i32, i32) {
    %c0_i32 = arith.constant 0 : i32
    %c0_i32_0 = arith.constant 0 : i32
    return %arg0, %c0_i32 : i32, i32
  }
  func.func @transform_1(%arg0: i32) -> (i32, i32, i32) {
    %c0_i32 = arith.constant 0 : i32
    %c0_i32_0 = arith.constant 0 : i32
    %c0_i32_1 = arith.constant 0 : i32
    %c0_i32_2 = arith.constant 0 : i32
    return %c0_i32, %c0_i32_0, %c0_i32_1 : i32, i32, i32
  }
  func.func @transform_2(%arg0: i32) -> (i32, i32) {
    %c0_i32 = arith.constant 0 : i32
    %c0_i32_0 = arith.constant 0 : i32
    return %arg0, %c0_i32 : i32, i32
  }
}

</mosaic_0001>

<llo_original>
// kernel: tpu_custom_call.1
$region0: #{tpu_custom_call.1}
  #allocation0 [shape = 'u32[]', space=smem, size = 0x4, offset = 0x4, fixed_abs, tag = 'smem constant byte address 0x4 - core index']
  #allocation1 [shape = 'u32[144,128]{1,0:T(1,128)}', space=vmem, size = 0x12000, scoped, tag = 'internal scratch']
  %s0 = inlined_call_operand.vmem [shape: s32[32,3], index: 0, kind: input, shape index: {}]
  %s1 = inlined_call_operand.vmem [shape: bf16[3,128,56], index: 1, kind: input, shape index: {}]
  %s2 = inlined_call_operand.hbm [shape: f32[32,56], index: 2, kind: output, shape index: {}]
  %s3 = sld [smem:[#allocation0]]
  $region41: #{tpu_custom_call.1} parent=0
    _
  %s5 = ssub.s32 1, %s3
  %s6 = scalar_select 0, %s5, %s3
  $region1: #{tpu_custom_call.1} parent=0
    #allocation2 [shape = 'u8[16384]{0}', space=vmem, size = 0x4000, scoped, tag = 'output window, operand 0']
    #allocation3 [shape = 's32[2]{0}', space=sflag, size = 0x8, scoped, tag = 'scoped memory for tpu_custom_call.1']
    %7 = vsyncpa [#allocation3], 0
    %s8 = scalar_lea.sflag [#allocation3], 1
    %9 = vsyncpa %s8, 0
    loop: start=0, step=1, limit=4
    $region2: #{tpu_custom_call.1} parent=1 // loop_pre_header
      _
    $region3: #{tpu_custom_call.1} parent=1 // loop_header
      %s11 = sphi 0, %s15
      %p12 = scmp.ge.s32.totalorder %s11, 4
      %s21 = sphi 0, %s23
      %s24 = sphi 0, %s21
      %s25 = sphi 0, %s24
      %s41 = sphi 0, %s25
      %s45 = sphi 0, %s45
      %s47 = sphi 0, %s45
      %s48 = sphi 0, %s47
      %s62 = sphi 0, %s48
      %s68 = sphi 0, %s70
      %s71 = sphi 0, %s68
      %s72 = sphi 0, %s71
      %s88 = sphi 0, %s72
    $region4: #{tpu_custom_call.1} parent=1 // loop_header_branch
      %14 = sbr.rel (%p12) target = $region8
    $region5: #{tpu_custom_call.1} parent=1 // loop_body
      %s16 = ssub.s32 %s11, 1
      %s17 = ssub.s32 %s11, 2
      %s18 = sadd.s32 %s11, 1
      %s19 = ssub.s32 %s11, %s18
      %p20 = scmp.eq.s32.totalorder %s19, 0
      %s22 = sadd.s32 %s21, 1
      %s23 = scalar_select %p20, %s21, %s22
      %p26 = pneg %p20
      %p27 = scmp.eq.s32.totalorder %s11, 1
      %p28 = por %p26, %p27
      %p29 = scmp.ne.s32.totalorder %s21, %s24
      %p30 = scmp.eq.s32.totalorder %s11, 0
      %p31 = por %p29, %p30
      %p32 = scmp.ne.s32.totalorder %s21, %s24
      %p33 = scmp.eq.s32.totalorder %s16, 1
      %p34 = por %p32, %p33
      %p35 = scmp.ne.s32.totalorder %s24, %s25
      %p36 = scmp.eq.s32.totalorder %s16, 0
      %p37 = por %p35, %p36
      %p38 = scmp.ne.s32.totalorder %s24, %s25
      %p39 = scmp.eq.s32.totalorder %s17, 1
      %p40 = por %p38, %p39
      %p42 = scmp.ne.s32.totalorder %s25, %s41
      %p43 = scmp.eq.s32.totalorder %s17, 0
      %p44 = por %p42, %p43
      %s46 = sadd.s32 %s45, 1
      %p49 = scmp.eq.s32.totalorder %s11, 1
      %p50 = scmp.ne.s32.totalorder %s45, %s47
      %p51 = scmp.eq.s32.totalorder %s11, 0
      %p52 = por %p50, %p51
      %p53 = scmp.ne.s32.totalorder %s45, %s47
      %p54 = scmp.eq.s32.totalorder %s16, 1
      %p55 = por %p53, %p54
      %p56 = scmp.ne.s32.totalorder %s47, %s48
      %p57 = scmp.eq.s32.totalorder %s16, 0
      %p58 = por %p56, %p57
      %p59 = scmp.ne.s32.totalorder %s47, %s48
      %p60 = scmp.eq.s32.totalorder %s17, 1
      %p61 = por %p59, %p60
      %p63 = scmp.ne.s32.totalorder %s48, %s62
      %p64 = scmp.eq.s32.totalorder %s17, 0
      %p65 = por %p63, %p64
      %s66 = ssub.s32 %s11, %s18
      %p67 = scmp.eq.s32.totalorder %s66, 0
      %s69 = sadd.s32 %s68, 1
      %s70 = scalar_select %p67, %s68, %s69
      %p73 = pneg %p67
      %p74 = scmp.eq.s32.totalorder %s11, 1
      %p75 = por %p73, %p74
      %p76 = scmp.ne.s32.totalorder %s68, %s71
      %p77 = scmp.eq.s32.totalorder %s11, 0
      %p78 = por %p76, %p77
      %p79 = scmp.ne.s32.totalorder %s68, %s71
      %p80 = scmp.eq.s32.totalorder %s16, 1
      %p81 = por %p79, %p80
      %p82 = scmp.ne.s32.totalorder %s71, %s72
      %p83 = scmp.eq.s32.totalorder %s16, 0
      %p84 = por %p82, %p83
      %p85 = scmp.ne.s32.totalorder %s71, %s72
      %p86 = scmp.eq.s32.totalorder %s17, 1
      %p87 = por %p85, %p86
      %p89 = scmp.ne.s32.totalorder %s72, %s88
      %p90 = scmp.eq.s32.totalorder %s17, 0
      %p91 = por %p89, %p90
      %p92 = scmp.le.s32.totalorder 1, %s11
      %p93 = scmp.lt.s32.totalorder %s11, 3
      %p94 = pnand %p92, %p93
      %p95 = pneg %p94
      // Predicated region
      $region9: #{tpu_custom_call.1} parent=5 // pred_check
        _
      $region10: #{tpu_custom_call.1} parent=5 // pred_check_branch
        %97 = sbr.rel (%p94) target = $region12
      $region11: #{tpu_custom_call.1} parent=5 // pred_region
        %s98 = ssub.s32 %s11, 1
        // Predicated region
        $region13: #{tpu_custom_call.1} parent=11 // pred_check
          %p99 = pneg %p58
        $region14: #{tpu_custom_call.1} parent=11 // pred_check_branch
          %101 = sbr.rel (%p99) target = $region16
        $region15: #{tpu_custom_call.1} parent=11 // pred_region
          _
        $region16: #{tpu_custom_call.1} parent=11 // pred_fallthru
          _
      $region12: #{tpu_custom_call.1} parent=5 // pred_fallthru
        _
      %p102 = scmp.lt.s32.totalorder %s11, 2
      // Predicated region
      $region17: #{tpu_custom_call.1} parent=5 // pred_check
        %p103 = pneg %p102
      $region18: #{tpu_custom_call.1} parent=5 // pred_check_branch
        %105 = sbr.rel (%p103) target = $region20
      $region19: #{tpu_custom_call.1} parent=5 // pred_region
        // Predicated region
        $region21: #{tpu_custom_call.1} parent=19 // pred_check
          %p106 = pneg %p31
        $region22: #{tpu_custom_call.1} parent=19 // pred_check_branch
          %108 = sbr.rel (%p106) target = $region24
        $region23: #{tpu_custom_call.1} parent=19 // pred_region
          %s109 = smul.u32 2, %s11
          %p110 = scmp.lt.s32.totalorder %s109, 3
          %s111 = scalar_select %p110, %s109, 3
          %s112 = smul.addr %s111, 8
          %s113 = scalar_lea.vmem %s0, %s112
          %s114 = smul.u32 2, %s11
        $region24: #{tpu_custom_call.1} parent=19 // pred_fallthru
          _
      $region20: #{tpu_custom_call.1} parent=5 // pred_fallthru
        _
      %p115 = scmp.le.s32.totalorder 1, %s11
      %p116 = scmp.lt.s32.totalorder %s11, 3
      %p117 = pnand %p115, %p116
      %p118 = pneg %p117
      // Predicated region
      $region25: #{tpu_custom_call.1} parent=5 // pred_check
        _
      $region26: #{tpu_custom_call.1} parent=5 // pred_check_branch
        %120 = sbr.rel (%p117) target = $region28
      $region27: #{tpu_custom_call.1} parent=5 // pred_region
        %s121 = ssub.s32 %s11, 1
        %s122 = smul.u32 2, %s16
        %p123 = scmp.lt.s32.totalorder %s122, 3
        %s124 = scalar_select %p123, %s122, 3
        %s125 = smul.addr %s124, 8
        %s126 = scalar_lea.vmem %s0, %s125
        %p127 = pneg %p37
        %p128 = pneg %p34
        %p129 = pneg %p58
        %p130 = pneg %p55
        %p131 = pneg %p84
        %p132 = pneg %p81
        %s133 = sand.u32 %s71, 1
        %s134 = scalar_lea.sflag [#allocation3], %s133
        %s135 = sand.u32 %s71, 1
        %s136 = smul.addr %s135, 16
        %s137 = scalar_lea.vmem [#allocation2], %s136
        %s138 = smul.u32 2, %s16
        %p139 = scmp.lt.s32.totalorder %s138, 3
        %s140 = scalar_select %p139, %s138, 3
        %s141 = smul.addr %s140, 8
        %s142 = scalar_lea.vmem %s0, %s141
        %s143 = smul.u32 2, %s16
        %s144 = smul.u32 2, %s16
        %v146 = vlaneseq
        %v147 = vand.u32 %v146, 127
        %v148 = vld [vmem:[%s142] sm:$0xff]
        %v149 = vld [vmem:[%s142 + $0x8] sm:$0xff]
        %150 = vset.pattern.permute.xlu0 0
        %151 = vperm.xlu0 %150, %v148
        %v152 = vpop.permute.xlu0 %151
        %153 = vset.pattern.permute.xlu0 0
        %154 = vperm.xlu0 %153, %v149
        %v155 = vpop.permute.xlu0 %154
        %vm156 = vcmp.eq.s32.totalorder %v147, %v152
        %vm157 = vcmp.eq.s32.totalorder %v147, %v155
        %158 = vset.pattern.permute.xlu0 1
        %159 = vperm.xlu0 %158, %v148
        %v160 = vpop.permute.xlu0 %159
        %161 = vset.pattern.permute.xlu0 1
        %162 = vperm.xlu0 %161, %v149
        %v163 = vpop.permute.xlu0 %162
        %vm164 = vcmp.eq.s32.totalorder %v147, %v160
        %vm165 = vcmp.eq.s32.totalorder %v147, %v163
        %vm166 = vmor %vm156, %vm164
        %vm167 = vmor %vm157, %vm165
        %168 = vset.pattern.permute.xlu0 2
        %169 = vperm.xlu0 %168, %v148
        %v170 = vpop.permute.xlu0 %169
        %171 = vset.pattern.permute.xlu0 2
        %172 = vperm.xlu0 %171, %v149
        %v173 = vpop.permute.xlu0 %172
        %vm174 = vcmp.eq.s32.totalorder %v147, %v170
        %vm175 = vcmp.eq.s32.totalorder %v147, %v173
        %vm176 = vmor %vm166, %vm174
        %vm177 = vmor %vm167, %vm175
        %v178 = vsel %vm176, 1.0, 0.0
        %v179 = vsel %vm177, 1.0, 0.0
        %v180 = vpack.c.bf16 %v179, %v178
        %v181 = vld [vmem:[%s1] sm:$0xf]
        %v182 = vld [vmem:[%s1 + $0x4] sm:$0xf]
        %v183 = vld [vmem:[%s1 + $0x8] sm:$0xf]
        %v184 = vld [vmem:[%s1 + $0xc] sm:$0xf]
        %v185 = vld [vmem:[%s1 + $0x10] sm:$0xf]
        %v186 = vld [vmem:[%s1 + $0x14] sm:$0xf]
        %v187 = vld [vmem:[%s1 + $0x18] sm:$0xf]
        %v188 = vld [vmem:[%s1 + $0x1c] sm:$0xf]
        %v189 = vld [vmem:[%s1 + $0x20] sm:$0xf]
        %v190 = vld [vmem:[%s1 + $0x24] sm:$0xf]
        %v191 = vld [vmem:[%s1 + $0x28] sm:$0xf]
        %v192 = vld [vmem:[%s1 + $0x2c] sm:$0xf]
        %v193 = vld [vmem:[%s1 + $0x30] sm:$0xf]
        %v194 = vld [vmem:[%s1 + $0x34] sm:$0xf]
        %v195 = vld [vmem:[%s1 + $0x38] sm:$0xf]
        %v196 = vld [vmem:[%s1 + $0x3c] sm:$0xf]
        %s197 = scalar_lea.vmem %s1, 64
        %v198 = vld [vmem:[%s197] sm:$0xf]
        %v199 = vld [vmem:[%s197 + $0x4] sm:$0xf]
        %v200 = vld [vmem:[%s197 + $0x8] sm:$0xf]
        %v201 = vld [vmem:[%s197 + $0xc] sm:$0xf]
        %v202 = vld [vmem:[%s197 + $0x10] sm:$0xf]
        %v203 = vld [vmem:[%s197 + $0x14] sm:$0xf]
        %v204 = vld [vmem:[%s197 + $0x18] sm:$0xf]
        %v205 = vld [vmem:[%s197 + $0x1c] sm:$0xf]
        %v206 = vld [vmem:[%s197 + $0x20] sm:$0xf]
        %v207 = vld [vmem:[%s197 + $0x24] sm:$0xf]
        %v208 = vld [vmem:[%s197 + $0x28] sm:$0xf]
        %v209 = vld [vmem:[%s197 + $0x2c] sm:$0xf]
        %v210 = vld [vmem:[%s197 + $0x30] sm:$0xf]
        %v211 = vld [vmem:[%s197 + $0x34] sm:$0xf]
        %v212 = vld [vmem:[%s197 + $0x38] sm:$0xf]
        %v213 = vld [vmem:[%s197 + $0x3c] sm:$0xf]
        %v230 = vunpack.c.l.b16 %v198
        %v231 = vunpack.c.l.b16 %v199
        %v232 = vunpack.c.l.b16 %v200
        %v233 = vunpack.c.l.b16 %v201
        %v234 = vunpack.c.l.b16 %v202
        %v235 = vunpack.c.l.b16 %v203
        %v236 = vunpack.c.l.b16 %v204
        %v237 = vunpack.c.l.b16 %v205
        %v238 = vunpack.c.l.b16 %v206
        %v239 = vunpack.c.l.b16 %v207
        %v240 = vunpack.c.l.b16 %v208
        %v241 = vunpack.c.l.b16 %v209
        %v242 = vunpack.c.l.b16 %v210
        %v243 = vunpack.c.l.b16 %v211
        %v244 = vunpack.c.l.b16 %v212
        %v245 = vunpack.c.l.b16 %v213
        %v246 = vpack.c.b16 %v231, %v230
        %v247 = vpack.c.b16 %v233, %v232
        %v248 = vpack.c.b16 %v235, %v234
        %v249 = vpack.c.b16 %v237, %v236
        %v250 = vpack.c.b16 %v239, %v238
        %v251 = vpack.c.b16 %v241, %v240
        %v252 = vpack.c.b16 %v243, %v242
        %v253 = vpack.c.b16 %v245, %v244
        %262 = vmatprep.subr.bf16.mxu0 0
        %263 = vmatpush1.bf16.msra.mxu0 %v246
        %264 = vmatprep.subr.bf16.mxu0 0
        %265 = vmatpush1.bf16.msra.mxu0 %v247
        %266 = vmatprep.subr.bf16.mxu0 0
        %267 = vmatpush1.bf16.msra.mxu0 %v248
        %268 = vmatprep.subr.bf16.mxu0 0
        %269 = vmatpush1.bf16.msra.mxu0 %v249
        %270 = vmatprep.subr.bf16.mxu0 0
        %271 = vmatpush1.bf16.msra.mxu0 %v250
        %272 = vmatprep.subr.bf16.mxu0 0
        %273 = vmatpush1.bf16.msra.mxu0 %v251
        %274 = vmatprep.subr.bf16.mxu0 0
        %275 = vmatpush1.bf16.msra.mxu0 %v252
        %276 = vmatprep.subr.bf16.mxu0 0
        %277 = vmatpush1.bf16.msra.mxu0 %v253
        %278 = vmatprep.subr.bf16.mxu0 0
        %279 = vmatpush1.bf16.msra.mxu0 0
        %280 = vmatprep.subr.bf16.mxu0 0
        %281 = vmatpush1.bf16.msra.mxu0 0
        %282 = vmatprep.subr.bf16.mxu0 0
        %283 = vmatpush1.bf16.msra.mxu0 0
        %284 = vmatprep.subr.bf16.mxu0 0
        %285 = vmatpush1.bf16.msra.mxu0 0
        %286 = vmatprep.subr.bf16.mxu0 0
        %287 = vmatpush1.bf16.msra.mxu0 0
        %288 = vmatprep.subr.bf16.mxu0 0
        %289 = vmatpush1.bf16.msra.mxu0 0
        %290 = vmatprep.subr.bf16.mxu0 0
        %291 = vmatpush1.bf16.msra.mxu0 0
        %292 = vmatprep.subr.bf16.mxu0 0
        %293 = vmatpush1.bf16.msra.mxu0 0
        %294 = vmatprep.mubr.bf16.mxu0 0
        %295 = vmatmul.mubr.bf16.gmra.mrb[0].mxu0 %v180
        %v296 = vpop.f32.mrb[0].mxu0
        %v297 = vadd.f32 0.0, %v296
        %v298 = vpop.f32.mrb[0].mxu0
        %v299 = vpop.f32.mrb[0].mxu0
        %v300 = vadd.f32 0.0, %v299
        %v301 = vpop.f32.mrb[0].mxu0
        %302 = vdwg.mxu0
        %v319 = vunpack.c.l.b16 %v181
        %v320 = vunpack.c.l.b16 %v182
        %v321 = vunpack.c.l.b16 %v183
        %v322 = vunpack.c.l.b16 %v184
        %v323 = vunpack.c.l.b16 %v185
        %v324 = vunpack.c.l.b16 %v186
        %v325 = vunpack.c.l.b16 %v187
        %v326 = vunpack.c.l.b16 %v188
        %v327 = vunpack.c.l.b16 %v189
        %v328 = vunpack.c.l.b16 %v190
        %v329 = vunpack.c.l.b16 %v191
        %v330 = vunpack.c.l.b16 %v192
        %v331 = vunpack.c.l.b16 %v193
        %v332 = vunpack.c.l.b16 %v194
        %v333 = vunpack.c.l.b16 %v195
        %v334 = vunpack.c.l.b16 %v196
        %v335 = vpack.c.b16 %v320, %v319
        %v336 = vpack.c.b16 %v322, %v321
        %v337 = vpack.c.b16 %v324, %v323
        %v338 = vpack.c.b16 %v326, %v325
        %v339 = vpack.c.b16 %v328, %v327
        %v340 = vpack.c.b16 %v330, %v329
        %v341 = vpack.c.b16 %v332, %v331
        %v342 = vpack.c.b16 %v334, %v333
        %351 = vmatprep.subr.bf16.mxu0 0
        %352 = vmatpush1.bf16.msra.mxu0 %v335
        %353 = vmatprep.subr.bf16.mxu0 0
        %354 = vmatpush1.bf16.msra.mxu0 %v336
        %355 = vmatprep.subr.bf16.mxu0 0
        %356 = vmatpush1.bf16.msra.mxu0 %v337
        %357 = vmatprep.subr.bf16.mxu0 0
        %358 = vmatpush1.bf16.msra.mxu0 %v338
        %359 = vmatprep.subr.bf16.mxu0 0
        %360 = vmatpush1.bf16.msra.mxu0 %v339
        %361 = vmatprep.subr.bf16.mxu0 0
        %362 = vmatpush1.bf16.msra.mxu0 %v340
        %363 = vmatprep.subr.bf16.mxu0 0
        %364 = vmatpush1.bf16.msra.mxu0 %v341
        %365 = vmatprep.subr.bf16.mxu0 0
        %366 = vmatpush1.bf16.msra.mxu0 %v342
        %367 = vmatprep.subr.bf16.mxu0 0
        %368 = vmatpush1.bf16.msra.mxu0 0
        %369 = vmatprep.subr.bf16.mxu0 0
        %370 = vmatpush1.bf16.msra.mxu0 0
        %371 = vmatprep.subr.bf16.mxu0 0
        %372 = vmatpush1.bf16.msra.mxu0 0
        %373 = vmatprep.subr.bf16.mxu0 0
        %374 = vmatpush1.bf16.msra.mxu0 0
        %375 = vmatprep.subr.bf16.mxu0 0
        %376 = vmatpush1.bf16.msra.mxu0 0
        %377 = vmatprep.subr.bf16.mxu0 0
        %378 = vmatpush1.bf16.msra.mxu0 0
        %379 = vmatprep.subr.bf16.mxu0 0
        %380 = vmatpush1.bf16.msra.mxu0 0
        %381 = vmatprep.subr.bf16.mxu0 0
        %382 = vmatpush1.bf16.msra.mxu0 0
        %383 = vmatprep.mubr.bf16.mxu0 0
        %384 = vmatmul.mubr.bf16.gmra.mrb[0].mxu0 %v180
        %v385 = vpop.f32.mrb[0].mxu0
        %v386 = vadd.f32 %v297, %v385
        %v387 = vpop.f32.mrb[0].mxu0
        %v388 = vpop.f32.mrb[0].mxu0
        %v389 = vadd.f32 %v300, %v388
        %v390 = vpop.f32.mrb[0].mxu0
        %391 = vdwg.mxu0
        %s392 = scalar_lea.vmem %s1, 128
        %v393 = vld [vmem:[%s392] sm:$0xf]
        %v394 = vld [vmem:[%s392 + $0x4] sm:$0xf]
        %v395 = vld [vmem:[%s392 + $0x8] sm:$0xf]
        %v396 = vld [vmem:[%s392 + $0xc] sm:$0xf]
        %v397 = vld [vmem:[%s392 + $0x10] sm:$0xf]
        %v398 = vld [vmem:[%s392 + $0x14] sm:$0xf]
        %v399 = vld [vmem:[%s392 + $0x18] sm:$0xf]
        %v400 = vld [vmem:[%s392 + $0x1c] sm:$0xf]
        %v401 = vld [vmem:[%s392 + $0x20] sm:$0xf]
        %v402 = vld [vmem:[%s392 + $0x24] sm:$0xf]
        %v403 = vld [vmem:[%s392 + $0x28] sm:$0xf]
        %v404 = vld [vmem:[%s392 + $0x2c] sm:$0xf]
        %v405 = vld [vmem:[%s392 + $0x30] sm:$0xf]
        %v406 = vld [vmem:[%s392 + $0x34] sm:$0xf]
        %v407 = vld [vmem:[%s392 + $0x38] sm:$0xf]
        %v408 = vld [vmem:[%s392 + $0x3c] sm:$0xf]
        %v425 = vunpack.c.l.b16 %v393
        %v426 = vunpack.c.l.b16 %v394
        %v427 = vunpack.c.l.b16 %v395
        %v428 = vunpack.c.l.b16 %v396
        %v429 = vunpack.c.l.b16 %v397
        %v430 = vunpack.c.l.b16 %v398
        %v431 = vunpack.c.l.b16 %v399
        %v432 = vunpack.c.l.b16 %v400
        %v433 = vunpack.c.l.b16 %v401
        %v434 = vunpack.c.l.b16 %v402
        %v435 = vunpack.c.l.b16 %v403
        %v436 = vunpack.c.l.b16 %v404
        %v437 = vunpack.c.l.b16 %v405
        %v438 = vunpack.c.l.b16 %v406
        %v439 = vunpack.c.l.b16 %v407
        %v440 = vunpack.c.l.b16 %v408
        %v441 = vpack.c.b16 %v426, %v425
        %v442 = vpack.c.b16 %v428, %v427
        %v443 = vpack.c.b16 %v430, %v429
        %v444 = vpack.c.b16 %v432, %v431
        %v445 = vpack.c.b16 %v434, %v433
        %v446 = vpack.c.b16 %v436, %v435
        %v447 = vpack.c.b16 %v438, %v437
        %v448 = vpack.c.b16 %v440, %v439
        %457 = vmatprep.subr.bf16.mxu0 0
        %458 = vmatpush1.bf16.msra.mxu0 %v441
        %459 = vmatprep.subr.bf16.mxu0 0
        %460 = vmatpush1.bf16.msra.mxu0 %v442
        %461 = vmatprep.subr.bf16.mxu0 0
        %462 = vmatpush1.bf16.msra.mxu0 %v443
        %463 = vmatprep.subr.bf16.mxu0 0
        %464 = vmatpush1.bf16.msra.mxu0 %v444
        %465 = vmatprep.subr.bf16.mxu0 0
        %466 = vmatpush1.bf16.msra.mxu0 %v445
        %467 = vmatprep.subr.bf16.mxu0 0
        %468 = vmatpush1.bf16.msra.mxu0 %v446
        %469 = vmatprep.subr.bf16.mxu0 0
        %470 = vmatpush1.bf16.msra.mxu0 %v447
        %471 = vmatprep.subr.bf16.mxu0 0
        %472 = vmatpush1.bf16.msra.mxu0 %v448
        %473 = vmatprep.subr.bf16.mxu0 0
        %474 = vmatpush1.bf16.msra.mxu0 0
        %475 = vmatprep.subr.bf16.mxu0 0
        %476 = vmatpush1.bf16.msra.mxu0 0
        %477 = vmatprep.subr.bf16.mxu0 0
        %478 = vmatpush1.bf16.msra.mxu0 0
        %479 = vmatprep.subr.bf16.mxu0 0
        %480 = vmatpush1.bf16.msra.mxu0 0
        %481 = vmatprep.subr.bf16.mxu0 0
        %482 = vmatpush1.bf16.msra.mxu0 0
        %483 = vmatprep.subr.bf16.mxu0 0
        %484 = vmatpush1.bf16.msra.mxu0 0
        %485 = vmatprep.subr.bf16.mxu0 0
        %486 = vmatpush1.bf16.msra.mxu0 0
        %487 = vmatprep.subr.bf16.mxu0 0
        %488 = vmatpush1.bf16.msra.mxu0 0
        %489 = vmatprep.mubr.bf16.mxu0 0
        %490 = vmatmul.mubr.bf16.gmra.mrb[0].mxu0 %v180
        %v491 = vpop.f32.mrb[0].mxu0
        %v492 = vadd.f32 0.0, %v491
        %v493 = vpop.f32.mrb[0].mxu0
        %v494 = vpop.f32.mrb[0].mxu0
        %v495 = vadd.f32 0.0, %v494
        %v496 = vpop.f32.mrb[0].mxu0
        %497 = vdwg.mxu0
        %v498 = vadd.f32 %v386, %v492
        %v499 = vadd.f32 %v389, %v495
        %vm500 = vcmask 457728
        %501 = vst.msk [vmem:[%s137] sm:$0xff] %vm500, %v498
        %502 = vst.msk [vmem:[%s137 + $0x8] sm:$0xff] %vm500, %v499
        %s503 = sand.u32 %s71, 1
        %s504 = scalar_lea.sflag [#allocation3], %s503
        %s505 = sand.u32 %s71, 1
        %s506 = smul.addr %s505, 16
        %s507 = scalar_lea.vmem [#allocation2], %s506
        // Predicated region
        $region29: #{tpu_custom_call.1} parent=27 // pred_check
          %p508 = pneg %p81
        $region30: #{tpu_custom_call.1} parent=27 // pred_check_branch
          %510 = sbr.rel (%p508) target = $region32
        $region31: #{tpu_custom_call.1} parent=27 // pred_region
          %s511 = smul.u32 2, %s16
          %s513 = ssub.s32 256, 256
          %514 = vsyncadd %s504, %s513
          %s515 = smul.addr %s511, 128
          %s516 = scalar_lea.hbm %s2, %s515
          %s517 = sshll.u32 %s507, 4
          %s518 = int_to_ptr.vmem [resolvable:$true] %s517
          %523 = dma.vmem_to_hbm [thread:$0]  %s518, 256, %s516, %s504, 128, 128, 8
        $region32: #{tpu_custom_call.1} parent=27 // pred_fallthru
          _
      $region28: #{tpu_custom_call.1} parent=5 // pred_fallthru
        _
      %p524 = scmp.le.s32.totalorder 2, %s11
      // Predicated region
      $region33: #{tpu_custom_call.1} parent=5 // pred_check
        %p525 = pneg %p524
      $region34: #{tpu_custom_call.1} parent=5 // pred_check_branch
        %527 = sbr.rel (%p525) target = $region36
      $region35: #{tpu_custom_call.1} parent=5 // pred_region
        %s528 = ssub.s32 %s11, 2
        // Predicated region
        $region37: #{tpu_custom_call.1} parent=35 // pred_check
          %p529 = pneg %p87
        $region38: #{tpu_custom_call.1} parent=35 // pred_check_branch
          %531 = sbr.rel (%p529) target = $region40
        $region39: #{tpu_custom_call.1} parent=35 // pred_region
          %s532 = sand.u32 %s72, 1
          %s533 = scalar_lea.sflag [#allocation3], %s532
          %s534 = sand.u32 %s72, 1
          %s535 = smul.addr %s534, 16
          %s536 = scalar_lea.vmem [#allocation2], %s535
          %537 = dma.done %s533, 256
        $region40: #{tpu_custom_call.1} parent=35 // pred_fallthru
          _
      $region36: #{tpu_custom_call.1} parent=5 // pred_fallthru
        _
    $region6: #{tpu_custom_call.1} parent=1 // loop_footer
      %s15 = sadd.s32 1, %s11
    $region7: #{tpu_custom_call.1} parent=1 // loop_footer_branch
      %10 = sbr.rel target = $region3
    $region8: #{tpu_custom_call.1} parent=1 // loop_exit
      _
    %538 = vsyncpa [#allocation3], 1
    %s539 = scalar_lea.sflag [#allocation3], 1
    %540 = vsyncpa %s539, 1

// kernel: tpu_custom_call.1
$region0: #{tpu_custom_call.1}
  #allocation0 [shape = 'u32[]', space=smem, size = 0x4, offset = 0x4, fixed_abs, tag = 'smem constant byte address 0x4 - core index']
  #allocation1 [shape = 'u32[144,128]{1,0:T(1,128)}', space=vmem, size = 0x12000, scoped, tag = 'internal scratch']
  %s0 = inlined_call_operand.vmem [shape: s32[32,3], index: 0, kind: input, shape index: {}]
  %s1 = inlined_call_operand.vmem [shape: bf16[3,128,56], index: 1, kind: input, shape index: {}]
  %s2 = inlined_call_operand.hbm [shape: f32[32,56], index: 2, kind: output, shape index: {}]
  %s3 = sld [smem:[#allocation0]]
  $region41: #{tpu_custom_call.1} parent=0
    _
  %s5 = ssub.s32 1, %s3
  %s6 = scalar_select 0, %s5, %s3
  $region1: #{tpu_custom_call.1} parent=0
    #allocation2 [shape = 'u8[16384]{0}', space=vmem, size = 0x4000, scoped, tag = 'output window, operand 0']
    #allocation3 [shape = 's32[2]{0}', space=sflag, size = 0x8, scoped, tag = 'scoped memory for tpu_custom_call.1']
    %7 = vsyncpa [#allocation3], 0
    %s8 = scalar_lea.sflag [#allocation3], 1
    %9 = vsyncpa %s8, 0
    loop: start=0, step=1, limit=4
    $region2: #{tpu_custom_call.1} parent=1 // loop_pre_header
      _
    $region3: #{tpu_custom_call.1} parent=1 // loop_header
      %s11 = sphi 0, %s15
      %p12 = scmp.ge.s32.totalorder %s11, 4
      %s21 = sphi 0, %s23
      %s24 = sphi 0, %s21
      %s25 = sphi 0, %s24
      %s41 = sphi 0, %s25
      %s45 = sphi 0, %s45
      %s47 = sphi 0, %s45
      %s48 = sphi 0, %s47
      %s62 = sphi 0, %s48
      %s68 = sphi 0, %s70
      %s71 = sphi 0, %s68
      %s72 = sphi 0, %s71
      %s88 = sphi 0, %s72
    $region4: #{tpu_custom_call.1} parent=1 // loop_header_branch
      %14 = sbr.rel (%p12) target = $region8
    $region5: #{tpu_custom_call.1} parent=1 // loop_body
      %s16 = ssub.s32 %s11, 1
      %s17 = ssub.s32 %s11, 2
      %s18 = sadd.s32 %s11, 1
      %s19 = ssub.s32 %s11, %s18
      %p20 = scmp.eq.s32.totalorder %s19, 0
      %s22 = sadd.s32 %s21, 1
      %s23 = scalar_select %p20, %s21, %s22
      %p26 = pneg %p20
      %p27 = scmp.eq.s32.totalorder %s11, 1
      %p28 = por %p26, %p27
      %p29 = scmp.ne.s32.totalorder %s21, %s24
      %p30 = scmp.eq.s32.totalorder %s11, 0
      %p31 = por %p29, %p30
      %p32 = scmp.ne.s32.totalorder %s21, %s24
      %p33 = scmp.eq.s32.totalorder %s16, 1
      %p34 = por %p32, %p33
      %p35 = scmp.ne.s32.totalorder %s24, %s25
      %p36 = scmp.eq.s32.totalorder %s16, 0
      %p37 = por %p35, %p36
      %p38 = scmp.ne.s32.totalorder %s24, %s25
      %p39 = scmp.eq.s32.totalorder %s17, 1
      %p40 = por %p38, %p39
      %p42 = scmp.ne.s32.totalorder %s25, %s41
      %p43 = scmp.eq.s32.totalorder %s17, 0
      %p44 = por %p42, %p43
      %s46 = sadd.s32 %s45, 1
      %p49 = scmp.eq.s32.totalorder %s11, 1
      %p50 = scmp.ne.s32.totalorder %s45, %s47
      %p51 = scmp.eq.s32.totalorder %s11, 0
      %p52 = por %p50, %p51
      %p53 = scmp.ne.s32.totalorder %s45, %s47
      %p54 = scmp.eq.s32.totalorder %s16, 1
      %p55 = por %p53, %p54
      %p56 = scmp.ne.s32.totalorder %s47, %s48
      %p57 = scmp.eq.s32.totalorder %s16, 0
      %p58 = por %p56, %p57
      %p59 = scmp.ne.s32.totalorder %s47, %s48
      %p60 = scmp.eq.s32.totalorder %s17, 1
      %p61 = por %p59, %p60
      %p63 = scmp.ne.s32.totalorder %s48, %s62
      %p64 = scmp.eq.s32.totalorder %s17, 0
      %p65 = por %p63, %p64
      %s66 = ssub.s32 %s11, %s18
      %p67 = scmp.eq.s32.totalorder %s66, 0
      %s69 = sadd.s32 %s68, 1
      %s70 = scalar_select %p67, %s68, %s69
      %p73 = pneg %p67
      %p74 = scmp.eq.s32.totalorder %s11, 1
      %p75 = por %p73, %p74
      %p76 = scmp.ne.s32.totalorder %s68, %s71
      %p77 = scmp.eq.s32.totalorder %s11, 0
      %p78 = por %p76, %p77
      %p79 = scmp.ne.s32.totalorder %s68, %s71
      %p80 = scmp.eq.s32.totalorder %s16, 1
      %p81 = por %p79, %p80
      %p82 = scmp.ne.s32.totalorder %s71, %s72
      %p83 = scmp.eq.s32.totalorder %s16, 0
      %p84 = por %p82, %p83
      %p85 = scmp.ne.s32.totalorder %s71, %s72
      %p86 = scmp.eq.s32.totalorder %s17, 1
      %p87 = por %p85, %p86
      %p89 = scmp.ne.s32.totalorder %s72, %s88
      %p90 = scmp.eq.s32.totalorder %s17, 0
      %p91 = por %p89, %p90
      %p92 = scmp.le.s32.totalorder 1, %s11
      %p93 = scmp.lt.s32.totalorder %s11, 3
      %p94 = pnand %p92, %p93
      %p95 = pneg %p94
      // Predicated region
      $region9: #{tpu_custom_call.1} parent=5 // pred_check
        _
      $region10: #{tpu_custom_call.1} parent=5 // pred_check_branch
        %97 = sbr.rel (%p94) target = $region12
      $region11: #{tpu_custom_call.1} parent=5 // pred_region
        %s98 = ssub.s32 %s11, 1
        // Predicated region
        $region13: #{tpu_custom_call.1} parent=11 // pred_check
          %p99 = pneg %p58
        $region14: #{tpu_custom_call.1} parent=11 // pred_check_branch
          %101 = sbr.rel (%p99) target = $region16
        $region15: #{tpu_custom_call.1} parent=11 // pred_region
          _
        $region16: #{tpu_custom_call.1} parent=11 // pred_fallthru
          _
      $region12: #{tpu_custom_call.1} parent=5 // pred_fallthru
        _
      %p102 = scmp.lt.s32.totalorder %s11, 2
      // Predicated region
      $region17: #{tpu_custom_call.1} parent=5 // pred_check
        %p103 = pneg %p102
      $region18: #{tpu_custom_call.1} parent=5 // pred_check_branch
        %105 = sbr.rel (%p103) target = $region20
      $region19: #{tpu_custom_call.1} parent=5 // pred_region
        // Predicated region
        $region21: #{tpu_custom_call.1} parent=19 // pred_check
          %p106 = pneg %p31
        $region22: #{tpu_custom_call.1} parent=19 // pred_check_branch
          %108 = sbr.rel (%p106) target = $region24
        $region23: #{tpu_custom_call.1} parent=19 // pred_region
          %s109 = smul.u32 2, %s11
          %p110 = scmp.lt.s32.totalorder %s109, 3
          %s111 = scalar_select %p110, %s109, 3
          %s112 = smul.addr %s111, 8
          %s113 = scalar_lea.vmem %s0, %s112
          %s114 = smul.u32 2, %s11
        $region24: #{tpu_custom_call.1} parent=19 // pred_fallthru
          _
      $region20: #{tpu_custom_call.1} parent=5 // pred_fallthru
        _
      %p115 = scmp.le.s32.totalorder 1, %s11
      %p116 = scmp.lt.s32.totalorder %s11, 3
      %p117 = pnand %p115, %p116
      %p118 = pneg %p117
      // Predicated region
      $region25: #{tpu_custom_call.1} parent=5 // pred_check
        _
      $region26: #{tpu_custom_call.1} parent=5 // pred_check_branch
        %120 = sbr.rel (%p117) target = $region28
      $region27: #{tpu_custom_call.1} parent=5 // pred_region
        %s121 = ssub.s32 %s11, 1
        %s122 = smul.u32 2, %s16
        %p123 = scmp.lt.s32.totalorder %s122, 3
        %s124 = scalar_select %p123, %s122, 3
        %s125 = smul.addr %s124, 8
        %s126 = scalar_lea.vmem %s0, %s125
        %p127 = pneg %p37
        %p128 = pneg %p34
        %p129 = pneg %p58
        %p130 = pneg %p55
        %p131 = pneg %p84
        %p132 = pneg %p81
        %s133 = sand.u32 %s71, 1
        %s134 = scalar_lea.sflag [#allocation3], %s133
        %s135 = sand.u32 %s71, 1
        %s136 = smul.addr %s135, 16
        %s137 = scalar_lea.vmem [#allocation2], %s136
        %s138 = smul.u32 2, %s16
        %p139 = scmp.lt.s32.totalorder %s138, 3
        %s140 = scalar_select %p139, %s138, 3
        %s141 = smul.addr %s140, 8
        %s142 = scalar_lea.vmem %s0, %s141
        %s143 = smul.u32 2, %s16
        %s144 = smul.u32 2, %s16
        %v146 = vlaneseq
        %v147 = vand.u32 %v146, 127
        %v148 = vld [vmem:[%s142] sm:$0xff]
        %v149 = vld [vmem:[%s142 + $0x8] sm:$0xff]
        %150 = vset.pattern.permute.xlu0 0
        %151 = vperm.xlu0 %150, %v148
        %v152 = vpop.permute.xlu0 %151
        %153 = vset.pattern.permute.xlu0 0
        %154 = vperm.xlu0 %153, %v149
        %v155 = vpop.permute.xlu0 %154
        %vm156 = vcmp.eq.s32.totalorder %v147, %v152
        %vm157 = vcmp.eq.s32.totalorder %v147, %v155
        %158 = vset.pattern.permute.xlu0 1
        %159 = vperm.xlu0 %158, %v148
        %v160 = vpop.permute.xlu0 %159
        %161 = vset.pattern.permute.xlu0 1
        %162 = vperm.xlu0 %161, %v149
        %v163 = vpop.permute.xlu0 %162
        %vm164 = vcmp.eq.s32.totalorder %v147, %v160
        %vm165 = vcmp.eq.s32.totalorder %v147, %v163
        %vm166 = vmor %vm156, %vm164
        %vm167 = vmor %vm157, %vm165
        %168 = vset.pattern.permute.xlu0 2
        %169 = vperm.xlu0 %168, %v148
        %v170 = vpop.permute.xlu0 %169
        %171 = vset.pattern.permute.xlu0 2
        %172 = vperm.xlu0 %171, %v149
        %v173 = vpop.permute.xlu0 %172
        %vm174 = vcmp.eq.s32.totalorder %v147, %v170
        %vm175 = vcmp.eq.s32.totalorder %v147, %v173
        %vm176 = vmor %vm166, %vm174
        %vm177 = vmor %vm167, %vm175
        %v178 = vsel %vm176, 1.0, 0.0
        %v179 = vsel %vm177, 1.0, 0.0
        %v180 = vpack.c.bf16 %v179, %v178
        %v181 = vld [vmem:[%s1] sm:$0xf]
        %v182 = vld [vmem:[%s1 + $0x4] sm:$0xf]
        %v183 = vld [vmem:[%s1 + $0x8] sm:$0xf]
        %v184 = vld [vmem:[%s1 + $0xc] sm:$0xf]
        %v185 = vld [vmem:[%s1 + $0x10] sm:$0xf]
        %v186 = vld [vmem:[%s1 + $0x14] sm:$0xf]
        %v187 = vld [vmem:[%s1 + $0x18] sm:$0xf]
        %v188 = vld [vmem:[%s1 + $0x1c] sm:$0xf]
        %v189 = vld [vmem:[%s1 + $0x20] sm:$0xf]
        %v190 = vld [vmem:[%s1 + $0x24] sm:$0xf]
        %v191 = vld [vmem:[%s1 + $0x28] sm:$0xf]
        %v192 = vld [vmem:[%s1 + $0x2c] sm:$0xf]
        %v193 = vld [vmem:[%s1 + $0x30] sm:$0xf]
        %v194 = vld [vmem:[%s1 + $0x34] sm:$0xf]
        %v195 = vld [vmem:[%s1 + $0x38] sm:$0xf]
        %v196 = vld [vmem:[%s1 + $0x3c] sm:$0xf]
        %s197 = scalar_lea.vmem %s1, 64
        %v198 = vld [vmem:[%s197] sm:$0xf]
        %v199 = vld [vmem:[%s197 + $0x4] sm:$0xf]
        %v200 = vld [vmem:[%s197 + $0x8] sm:$0xf]
        %v201 = vld [vmem:[%s197 + $0xc] sm:$0xf]
        %v202 = vld [vmem:[%s197 + $0x10] sm:$0xf]
        %v203 = vld [vmem:[%s197 + $0x14] sm:$0xf]
        %v204 = vld [vmem:[%s197 + $0x18] sm:$0xf]
        %v205 = vld [vmem:[%s197 + $0x1c] sm:$0xf]
        %v206 = vld [vmem:[%s197 + $0x20] sm:$0xf]
        %v207 = vld [vmem:[%s197 + $0x24] sm:$0xf]
        %v208 = vld [vmem:[%s197 + $0x28] sm:$0xf]
        %v209 = vld [vmem:[%s197 + $0x2c] sm:$0xf]
        %v210 = vld [vmem:[%s197 + $0x30] sm:$0xf]
        %v211 = vld [vmem:[%s197 + $0x34] sm:$0xf]
        %v212 = vld [vmem:[%s197 + $0x38] sm:$0xf]
        %v213 = vld [vmem:[%s197 + $0x3c] sm:$0xf]
        %v230 = vunpack.c.l.b16 %v198
        %v231 = vunpack.c.l.b16 %v199
        %v232 = vunpack.c.l.b16 %v200
        %v233 = vunpack.c.l.b16 %v201
        %v234 = vunpack.c.l.b16 %v202
        %v235 = vunpack.c.l.b16 %v203
        %v236 = vunpack.c.l.b16 %v204
        %v237 = vunpack.c.l.b16 %v205
        %v238 = vunpack.c.l.b16 %v206
        %v239 = vunpack.c.l.b16 %v207
        %v240 = vunpack.c.l.b16 %v208
        %v241 = vunpack.c.l.b16 %v209
        %v242 = vunpack.c.l.b16 %v210
        %v243 = vunpack.c.l.b16 %v211
        %v244 = vunpack.c.l.b16 %v212
        %v245 = vunpack.c.l.b16 %v213
        %v246 = vpack.c.b16 %v231, %v230
        %v247 = vpack.c.b16 %v233, %v232
        %v248 = vpack.c.b16 %v235, %v234
        %v249 = vpack.c.b16 %v237, %v236
        %v250 = vpack.c.b16 %v239, %v238
        %v251 = vpack.c.b16 %v241, %v240
        %v252 = vpack.c.b16 %v243, %v242
        %v253 = vpack.c.b16 %v245, %v244
        %262 = vmatprep.subr.bf16.mxu0 0
        %263 = vmatpush1.bf16.msra.mxu0 %v246
        %264 = vmatprep.subr.bf16.mxu0 0
        %265 = vmatpush1.bf16.msra.mxu0 %v247
        %266 = vmatprep.subr.bf16.mxu0 0
        %267 = vmatpush1.bf16.msra.mxu0 %v248
        %268 = vmatprep.subr.bf16.mxu0 0
        %269 = vmatpush1.bf16.msra.mxu0 %v249
        %270 = vmatprep.subr.bf16.mxu0 0
        %271 = vmatpush1.bf16.msra.mxu0 %v250
        %272 = vmatprep.subr.bf16.mxu0 0
        %273 = vmatpush1.bf16.msra.mxu0 %v251
        %274 = vmatprep.subr.bf16.mxu0 0
        %275 = vmatpush1.bf16.msra.mxu0 %v252
        %276 = vmatprep.subr.bf16.mxu0 0
        %277 = vmatpush1.bf16.msra.mxu0 %v253
        %278 = vmatprep.subr.bf16.mxu0 0
        %279 = vmatpush1.bf16.msra.mxu0 0
        %280 = vmatprep.subr.bf16.mxu0 0
        %281 = vmatpush1.bf16.msra.mxu0 0
        %282 = vmatprep.subr.bf16.mxu0 0
        %283 = vmatpush1.bf16.msra.mxu0 0
        %284 = vmatprep.subr.bf16.mxu0 0
        %285 = vmatpush1.bf16.msra.mxu0 0
        %286 = vmatprep.subr.bf16.mxu0 0
        %287 = vmatpush1.bf16.msra.mxu0 0
        %288 = vmatprep.subr.bf16.mxu0 0
        %289 = vmatpush1.bf16.msra.mxu0 0
        %290 = vmatprep.subr.bf16.mxu0 0
        %291 = vmatpush1.bf16.msra.mxu0 0
        %292 = vmatprep.subr.bf16.mxu0 0
        %293 = vmatpush1.bf16.msra.mxu0 0
        %294 = vmatprep.mubr.bf16.mxu0 0
        %295 = vmatmul.mubr.bf16.gmra.mrb[0].mxu0 %v180
        %v296 = vpop.f32.mrb[0].mxu0
        %v297 = vadd.f32 0.0, %v296
        %v298 = vpop.f32.mrb[0].mxu0
        %v299 = vpop.f32.mrb[0].mxu0
        %v300 = vadd.f32 0.0, %v299
        %v301 = vpop.f32.mrb[0].mxu0
        %302 = vdwg.mxu0
        %v319 = vunpack.c.l.b16 %v181
        %v320 = vunpack.c.l.b16 %v182
        %v321 = vunpack.c.l.b16 %v183
        %v322 = vunpack.c.l.b16 %v184
        %v323 = vunpack.c.l.b16 %v185
        %v324 = vunpack.c.l.b16 %v186
        %v325 = vunpack.c.l.b16 %v187
        %v326 = vunpack.c.l.b16 %v188
        %v327 = vunpack.c.l.b16 %v189
        %v328 = vunpack.c.l.b16 %v190
        %v329 = vunpack.c.l.b16 %v191
        %v330 = vunpack.c.l.b16 %v192
        %v331 = vunpack.c.l.b16 %v193
        %v332 = vunpack.c.l.b16 %v194
        %v333 = vunpack.c.l.b16 %v195
        %v334 = vunpack.c.l.b16 %v196
        %v335 = vpack.c.b16 %v320, %v319
        %v336 = vpack.c.b16 %v322, %v321
        %v337 = vpack.c.b16 %v324, %v323
        %v338 = vpack.c.b16 %v326, %v325
        %v339 = vpack.c.b16 %v328, %v327
        %v340 = vpack.c.b16 %v330, %v329
        %v341 = vpack.c.b16 %v332, %v331
        %v342 = vpack.c.b16 %v334, %v333
        %351 = vmatprep.subr.bf16.mxu0 0
        %352 = vmatpush1.bf16.msra.mxu0 %v335
        %353 = vmatprep.subr.bf16.mxu0 0
        %354 = vmatpush1.bf16.msra.mxu0 %v336
        %355 = vmatprep.subr.bf16.mxu0 0
        %356 = vmatpush1.bf16.msra.mxu0 %v337
        %357 = vmatprep.subr.bf16.mxu0 0
        %358 = vmatpush1.bf16.msra.mxu0 %v338
        %359 = vmatprep.subr.bf16.mxu0 0
        %360 = vmatpush1.bf16.msra.mxu0 %v339
        %361 = vmatprep.subr.bf16.mxu0 0
        %362 = vmatpush1.bf16.msra.mxu0 %v340
        %363 = vmatprep.subr.bf16.mxu0 0
        %364 = vmatpush1.bf16.msra.mxu0 %v341
        %365 = vmatprep.subr.bf16.mxu0 0
        %366 = vmatpush1.bf16.msra.mxu0 %v342
        %367 = vmatprep.subr.bf16.mxu0 0
        %368 = vmatpush1.bf16.msra.mxu0 0
        %369 = vmatprep.subr.bf16.mxu0 0
        %370 = vmatpush1.bf16.msra.mxu0 0
        %371 = vmatprep.subr.bf16.mxu0 0
        %372 = vmatpush1.bf16.msra.mxu0 0
        %373 = vmatprep.subr.bf16.mxu0 0
        %374 = vmatpush1.bf16.msra.mxu0 0
        %375 = vmatprep.subr.bf16.mxu0 0
        %376 = vmatpush1.bf16.msra.mxu0 0
        %377 = vmatprep.subr.bf16.mxu0 0
        %378 = vmatpush1.bf16.msra.mxu0 0
        %379 = vmatprep.subr.bf16.mxu0 0
        %380 = vmatpush1.bf16.msra.mxu0 0
        %381 = vmatprep.subr.bf16.mxu0 0
        %382 = vmatpush1.bf16.msra.mxu0 0
        %383 = vmatprep.mubr.bf16.mxu0 0
        %384 = vmatmul.mubr.bf16.gmra.mrb[0].mxu0 %v180
        %v385 = vpop.f32.mrb[0].mxu0
        %v386 = vadd.f32 %v297, %v385
        %v387 = vpop.f32.mrb[0].mxu0
        %v388 = vpop.f32.mrb[0].mxu0
        %v389 = vadd.f32 %v300, %v388
        %v390 = vpop.f32.mrb[0].mxu0
        %391 = vdwg.mxu0
        %s392 = scalar_lea.vmem %s1, 128
        %v393 = vld [vmem:[%s392] sm:$0xf]
        %v394 = vld [vmem:[%s392 + $0x4] sm:$0xf]
        %v395 = vld [vmem:[%s392 + $0x8] sm:$0xf]
        %v396 = vld [vmem:[%s392 + $0xc] sm:$0xf]
        %v397 = vld [vmem:[%s392 + $0x10] sm:$0xf]
        %v398 = vld [vmem:[%s392 + $0x14] sm:$0xf]
        %v399 = vld [vmem:[%s392 + $0x18] sm:$0xf]
        %v400 = vld [vmem:[%s392 + $0x1c] sm:$0xf]
        %v401 = vld [vmem:[%s392 + $0x20] sm:$0xf]
        %v402 = vld [vmem:[%s392 + $0x24] sm:$0xf]
        %v403 = vld [vmem:[%s392 + $0x28] sm:$0xf]
        %v404 = vld [vmem:[%s392 + $0x2c] sm:$0xf]
        %v405 = vld [vmem:[%s392 + $0x30] sm:$0xf]
        %v406 = vld [vmem:[%s392 + $0x34] sm:$0xf]
        %v407 = vld [vmem:[%s392 + $0x38] sm:$0xf]
        %v408 = vld [vmem:[%s392 + $0x3c] sm:$0xf]
        %v425 = vunpack.c.l.b16 %v393
        %v426 = vunpack.c.l.b16 %v394
        %v427 = vunpack.c.l.b16 %v395
        %v428 = vunpack.c.l.b16 %v396
        %v429 = vunpack.c.l.b16 %v397
        %v430 = vunpack.c.l.b16 %v398
        %v431 = vunpack.c.l.b16 %v399
        %v432 = vunpack.c.l.b16 %v400
        %v433 = vunpack.c.l.b16 %v401
        %v434 = vunpack.c.l.b16 %v402
        %v435 = vunpack.c.l.b16 %v403
        %v436 = vunpack.c.l.b16 %v404
        %v437 = vunpack.c.l.b16 %v405
        %v438 = vunpack.c.l.b16 %v406
        %v439 = vunpack.c.l.b16 %v407
        %v440 = vunpack.c.l.b16 %v408
        %v441 = vpack.c.b16 %v426, %v425
        %v442 = vpack.c.b16 %v428, %v427
        %v443 = vpack.c.b16 %v430, %v429
        %v444 = vpack.c.b16 %v432, %v431
        %v445 = vpack.c.b16 %v434, %v433
        %v446 = vpack.c.b16 %v436, %v435
        %v447 = vpack.c.b16 %v438, %v437
        %v448 = vpack.c.b16 %v440, %v439
        %457 = vmatprep.subr.bf16.mxu0 0
        %458 = vmatpush1.bf16.msra.mxu0 %v441
        %459 = vmatprep.subr.bf16.mxu0 0
        %460 = vmatpush1.bf16.msra.mxu0 %v442
        %461 = vmatprep.subr.bf16.mxu0 0
        %462 = vmatpush1.bf16.msra.mxu0 %v443
        %463 = vmatprep.subr.bf16.mxu0 0
        %464 = vmatpush1.bf16.msra.mxu0 %v444
        %465 = vmatprep.subr.bf16.mxu0 0
        %466 = vmatpush1.bf16.msra.mxu0 %v445
        %467 = vmatprep.subr.bf16.mxu0 0
        %468 = vmatpush1.bf16.msra.mxu0 %v446
        %469 = vmatprep.subr.bf16.mxu0 0
        %470 = vmatpush1.bf16.msra.mxu0 %v447
        %471 = vmatprep.subr.bf16.mxu0 0
        %472 = vmatpush1.bf16.msra.mxu0 %v448
        %473 = vmatprep.subr.bf16.mxu0 0
        %474 = vmatpush1.bf16.msra.mxu0 0
        %475 = vmatprep.subr.bf16.mxu0 0
        %476 = vmatpush1.bf16.msra.mxu0 0
        %477 = vmatprep.subr.bf16.mxu0 0
        %478 = vmatpush1.bf16.msra.mxu0 0
        %479 = vmatprep.subr.bf16.mxu0 0
        %480 = vmatpush1.bf16.msra.mxu0 0
        %481 = vmatprep.subr.bf16.mxu0 0
        %482 = vmatpush1.bf16.msra.mxu0 0
        %483 = vmatprep.subr.bf16.mxu0 0
        %484 = vmatpush1.bf16.msra.mxu0 0
        %485 = vmatprep.subr.bf16.mxu0 0
        %486 = vmatpush1.bf16.msra.mxu0 0
        %487 = vmatprep.subr.bf16.mxu0 0
        %488 = vmatpush1.bf16.msra.mxu0 0
        %489 = vmatprep.mubr.bf16.mxu0 0
        %490 = vmatmul.mubr.bf16.gmra.mrb[0].mxu0 %v180
        %v491 = vpop.f32.mrb[0].mxu0
        %v492 = vadd.f32 0.0, %v491
        %v493 = vpop.f32.mrb[0].mxu0
        %v494 = vpop.f32.mrb[0].mxu0
        %v495 = vadd.f32 0.0, %v494
        %v496 = vpop.f32.mrb[0].mxu0
        %497 = vdwg.mxu0
        %v498 = vadd.f32 %v386, %v492
        %v499 = vadd.f32 %v389, %v495
        %vm500 = vcmask 457728
        %501 = vst.msk [vmem:[%s137] sm:$0xff] %vm500, %v498
        %502 = vst.msk [vmem:[%s137 + $0x8] sm:$0xff] %vm500, %v499
        %s503 = sand.u32 %s71, 1
        %s504 = scalar_lea.sflag [#allocation3], %s503
        %s505 = sand.u32 %s71, 1
        %s506 = smul.addr %s505, 16
        %s507 = scalar_lea.vmem [#allocation2], %s506
        // Predicated region
        $region29: #{tpu_custom_call.1} parent=27 // pred_check
          %p508 = pneg %p81
        $region30: #{tpu_custom_call.1} parent=27 // pred_check_branch
          %510 = sbr.rel (%p508) target = $region32
        $region31: #{tpu_custom_call.1} parent=27 // pred_region
          %s511 = smul.u32 2, %s16
          %s513 = ssub.s32 256, 256
          %514 = vsyncadd %s504, %s513
          %s515 = smul.addr %s511, 128
          %s516 = scalar_lea.hbm %s2, %s515
          %s517 = sshll.u32 %s507, 4
          %s518 = int_to_ptr.vmem [resolvable:$true] %s517
          %523 = dma.vmem_to_hbm [thread:$0]  %s518, 256, %s516, %s504, 128, 128, 8
        $region32: #{tpu_custom_call.1} parent=27 // pred_fallthru
          _
      $region28: #{tpu_custom_call.1} parent=5 // pred_fallthru
        _
      %p524 = scmp.le.s32.totalorder 2, %s11
      // Predicated region
      $region33: #{tpu_custom_call.1} parent=5 // pred_check
        %p525 = pneg %p524
      $region34: #{tpu_custom_call.1} parent=5 // pred_check_branch
        %527 = sbr.rel (%p525) target = $region36
      $region35: #{tpu_custom_call.1} parent=5 // pred_region
        %s528 = ssub.s32 %s11, 2
        // Predicated region
        $region37: #{tpu_custom_call.1} parent=35 // pred_check
          %p529 = pneg %p87
        $region38: #{tpu_custom_call.1} parent=35 // pred_check_branch
          %531 = sbr.rel (%p529) target = $region40
        $region39: #{tpu_custom_call.1} parent=35 // pred_region
          %s532 = sand.u32 %s72, 1
          %s533 = scalar_lea.sflag [#allocation3], %s532
          %s534 = sand.u32 %s72, 1
          %s535 = smul.addr %s534, 16
          %s536 = scalar_lea.vmem [#allocation2], %s535
          %537 = dma.done %s533, 256
        $region40: #{tpu_custom_call.1} parent=35 // pred_fallthru
          _
      $region36: #{tpu_custom_call.1} parent=5 // pred_fallthru
        _
    $region6: #{tpu_custom_call.1} parent=1 // loop_footer
      %s15 = sadd.s32 1, %s11
    $region7: #{tpu_custom_call.1} parent=1 // loop_footer_branch
      %10 = sbr.rel target = $region3
    $region8: #{tpu_custom_call.1} parent=1 // loop_exit
      _
    %538 = vsyncpa [#allocation3], 1
    %s539 = scalar_lea.sflag [#allocation3], 1
    %540 = vsyncpa %s539, 1

</llo_original>
